<compile_context>
chip_gen: v5e
topology: v5e:2x2
jax: 0.10.0
libtpu: 0.0.40
codegen_flags: <defaults>
</compile_context>

<pallas_src>
import numpy as np
import jax
import jax.numpy as jnp
from jax.experimental import pallas as pl
from jax.experimental.pallas import tpu as pltpu


def _round_up(a: int, b: int) -> int:
    return (a + b - 1) // b * b


def _cdiv(a: int, b: int) -> int:
    return -(-a // b)


def _pick_tile_b(B: int, N: int, M: int) -> int:
    """Largest batch tile whose VMEM footprint fits a v7x-safe budget."""
    # Per batch row (f32): 2x double-buffered x block + 2x double-buffered
    # output block + ~1 working copy of the output row.
    per_row_bytes = 4 * (2 * N + 2 * M + M)
    budget = 40 * 1024 * 1024          # stay safely under v7x's 64 MiB physical VMEM
    tb = min(512, budget // max(per_row_bytes, 1))
    if tb >= B:
        if B > 8:
            # Whole batch fits in one block -> split into two blocks so the
            # second TensorCore (v7x) gets work.  Tile must be a multiple of 8
            # (or equal to the full batch dim).
            half = _round_up(_cdiv(B, 2), 8)
            return half if half < B else B
        return B
    # TODO(synk): add M-axis tiling for very large input_dim (single output
    # block per batch tile assumes M fits VMEM; fine for realistic field counts).
    return max(8, (tb // 8) * 8)


def _make_interaction_kernel(N: int):
    # Static per-row output offsets (row-major upper triangle, matches
    # torch.triu_indices ordering).
    offsets = tuple(i * N - (i * (i - 1)) // 2 for i in range(N))

    def kernel(x_ref, o_ref):
        x = x_ref[...]                                   # (tile_b, N)
        # Unrolled static loop over triu rows: 1 VPU multiply per output
        # element, stores at static offsets into the lane-dense output block.
        for i in range(N):
            seg = N - i
            o_ref[:, offsets[i]:offsets[i] + seg] = x[:, i:] * x[:, i:i + 1]

    return kernel


def interaction_layer(x: jax.Array) -> jax.Array:
    """Pallas equivalent of InteractionLayer.forward. x: (B, N)."""
    B, N = x.shape
    M = N * (N + 1) // 2

    tile_b = _pick_tile_b(B, N, M)
    grid = (_cdiv(B, tile_b),)

    # Explicit VMEM accounting for the compiler limit (double-buffered x and
    # out blocks + working copy), clamped to [32 MiB, 48 MiB].
    est_vmem = 4 * tile_b * (2 * N + 3 * M) + (2 << 20)
    vmem_limit = min(48 * 1024 * 1024, max(32 * 1024 * 1024, est_vmem))

    return pl.pallas_call(
        _make_interaction_kernel(N),
        out_shape=jax.ShapeDtypeStruct((B, M), x.dtype),   # unpadded output, no wrapper slice
        grid=grid,
        in_specs=[
            pl.BlockSpec((tile_b, N), lambda bi: (bi, 0)),  # x batch tile (full N)
        ],
        out_specs=pl.BlockSpec((tile_b, M), lambda bi: (bi, 0)),  # full M per block
        compiler_params=pltpu.CompilerParams(
            dimension_semantics=("parallel",),
            vmem_limit_bytes=vmem_limit,
        ),
    )(x)


def interaction_layer_ref(x: jax.Array) -> jax.Array:
    """Pure-JAX reference matching the PyTorch module exactly."""
    N = x.shape[1]
    outer = x[:, :, None] * x[:, None, :]          # (B, N, N)
    rows, cols = np.triu_indices(N, k=0)           # same row-major order as torch
    return outer[:, rows, cols]                    # (B, N*(N+1)//2)


if __name__ == "__main__":
    B, N = 8, 16                                   # small test shape; input_dim = N
    key = jax.random.PRNGKey(0)
    x = jax.random.normal(key, (B, N), dtype=jnp.float32)

    out = jax.block_until_ready(interaction_layer(x))

    ref = interaction_layer_ref(x)
    assert out.shape == (B, N * (N + 1) // 2), out.shape
    np.testing.assert_allclose(np.asarray(out), np.asarray(ref), rtol=1e-6, atol=1e-6)

    print("KERNEL_OK")
</pallas_src>

<mosaic_0001>
module attributes {stable_mosaic.version = 11 : i64} {
  func.func @kernel(%arg0: i32, %arg1: memref<8x16xf32, #tpu.memory_space<vmem>>, %arg2: memref<8x136xf32, #tpu.memory_space<vmem>>) attributes {dimension_semantics = [#tpu.dimension_semantics<parallel>], iteration_bounds = array<i64: 1>, scalar_prefetch = 0 : i64, scratch_operands = 0 : i64, tpu.core_type = #tpu.core_type<tc>, window_params = [{transform_indices = @transform_0, window_bounds = array<i64: 8, 16>}, {transform_indices = @transform_1, window_bounds = array<i64: 8, 136>}]} {
    %c0 = arith.constant 0 : index
    %c0_0 = arith.constant 0 : index
    %0 = vector.load %arg1[%c0, %c0_0] : memref<8x16xf32, #tpu.memory_space<vmem>>, vector<8x16xf32>
    %1 = vector.extract_strided_slice %0 {offsets = [0, 0], sizes = [8, 1], strides = [1, 1]} : vector<8x16xf32> to vector<8x1xf32>
    %2 = vector.broadcast %1 : vector<8x1xf32> to vector<8x16xf32>
    %3 = arith.mulf %0, %2 : vector<8x16xf32>
    %c0_1 = arith.constant 0 : index
    %c0_2 = arith.constant 0 : index
    %4 = vector.load %arg2[%c0_1, %c0_2] : memref<8x136xf32, #tpu.memory_space<vmem>>, vector<8x16xf32>
    tpu.vector_store %arg2[%c0_1, %c0_2], %3 {strides = array<i32>} : memref<8x136xf32, #tpu.memory_space<vmem>>, vector<8x16xf32>,
    %5 = vector.extract_strided_slice %0 {offsets = [0, 1], sizes = [8, 15], strides = [1, 1]} : vector<8x16xf32> to vector<8x15xf32>
    %6 = vector.extract_strided_slice %0 {offsets = [0, 1], sizes = [8, 1], strides = [1, 1]} : vector<8x16xf32> to vector<8x1xf32>
    %7 = vector.broadcast %6 : vector<8x1xf32> to vector<8x15xf32>
    %8 = arith.mulf %5, %7 : vector<8x15xf32>
    %c0_3 = arith.constant 0 : index
    %c16 = arith.constant 16 : index
    %9 = vector.load %arg2[%c0_3, %c16] : memref<8x136xf32, #tpu.memory_space<vmem>>, vector<8x15xf32>
    tpu.vector_store %arg2[%c0_3, %c16], %8 {strides = array<i32>} : memref<8x136xf32, #tpu.memory_space<vmem>>, vector<8x15xf32>,
    %10 = vector.extract_strided_slice %0 {offsets = [0, 2], sizes = [8, 14], strides = [1, 1]} : vector<8x16xf32> to vector<8x14xf32>
    %11 = vector.extract_strided_slice %0 {offsets = [0, 2], sizes = [8, 1], strides = [1, 1]} : vector<8x16xf32> to vector<8x1xf32>
    %12 = vector.broadcast %11 : vector<8x1xf32> to vector<8x14xf32>
    %13 = arith.mulf %10, %12 : vector<8x14xf32>
    %c0_4 = arith.constant 0 : index
    %c31 = arith.constant 31 : index
    %14 = vector.load %arg2[%c0_4, %c31] : memref<8x136xf32, #tpu.memory_space<vmem>>, vector<8x14xf32>
    tpu.vector_store %arg2[%c0_4, %c31], %13 {strides = array<i32>} : memref<8x136xf32, #tpu.memory_space<vmem>>, vector<8x14xf32>,
    %15 = vector.extract_strided_slice %0 {offsets = [0, 3], sizes = [8, 13], strides = [1, 1]} : vector<8x16xf32> to vector<8x13xf32>
    %16 = vector.extract_strided_slice %0 {offsets = [0, 3], sizes = [8, 1], strides = [1, 1]} : vector<8x16xf32> to vector<8x1xf32>
    %17 = vector.broadcast %16 : vector<8x1xf32> to vector<8x13xf32>
    %18 = arith.mulf %15, %17 : vector<8x13xf32>
    %c0_5 = arith.constant 0 : index
    %c45 = arith.constant 45 : index
    %19 = vector.load %arg2[%c0_5, %c45] : memref<8x136xf32, #tpu.memory_space<vmem>>, vector<8x13xf32>
    tpu.vector_store %arg2[%c0_5, %c45], %18 {strides = array<i32>} : memref<8x136xf32, #tpu.memory_space<vmem>>, vector<8x13xf32>,
    %20 = vector.extract_strided_slice %0 {offsets = [0, 4], sizes = [8, 12], strides = [1, 1]} : vector<8x16xf32> to vector<8x12xf32>
    %21 = vector.extract_strided_slice %0 {offsets = [0, 4], sizes = [8, 1], strides = [1, 1]} : vector<8x16xf32> to vector<8x1xf32>
    %22 = vector.broadcast %21 : vector<8x1xf32> to vector<8x12xf32>
    %23 = arith.mulf %20, %22 : vector<8x12xf32>
    %c0_6 = arith.constant 0 : index
    %c58 = arith.constant 58 : index
    %24 = vector.load %arg2[%c0_6, %c58] : memref<8x136xf32, #tpu.memory_space<vmem>>, vector<8x12xf32>
    tpu.vector_store %arg2[%c0_6, %c58], %23 {strides = array<i32>} : memref<8x136xf32, #tpu.memory_space<vmem>>, vector<8x12xf32>,
    %25 = vector.extract_strided_slice %0 {offsets = [0, 5], sizes = [8, 11], strides = [1, 1]} : vector<8x16xf32> to vector<8x11xf32>
    %26 = vector.extract_strided_slice %0 {offsets = [0, 5], sizes = [8, 1], strides = [1, 1]} : vector<8x16xf32> to vector<8x1xf32>
    %27 = vector.broadcast %26 : vector<8x1xf32> to vector<8x11xf32>
    %28 = arith.mulf %25, %27 : vector<8x11xf32>
    %c0_7 = arith.constant 0 : index
    %c70 = arith.constant 70 : index
    %29 = vector.load %arg2[%c0_7, %c70] : memref<8x136xf32, #tpu.memory_space<vmem>>, vector<8x11xf32>
    tpu.vector_store %arg2[%c0_7, %c70], %28 {strides = array<i32>} : memref<8x136xf32, #tpu.memory_space<vmem>>, vector<8x11xf32>,
    %30 = vector.extract_strided_slice %0 {offsets = [0, 6], sizes = [8, 10], strides = [1, 1]} : vector<8x16xf32> to vector<8x10xf32>
    %31 = vector.extract_strided_slice %0 {offsets = [0, 6], sizes = [8, 1], strides = [1, 1]} : vector<8x16xf32> to vector<8x1xf32>
    %32 = vector.broadcast %31 : vector<8x1xf32> to vector<8x10xf32>
    %33 = arith.mulf %30, %32 : vector<8x10xf32>
    %c0_8 = arith.constant 0 : index
    %c81 = arith.constant 81 : index
    %34 = vector.load %arg2[%c0_8, %c81] : memref<8x136xf32, #tpu.memory_space<vmem>>, vector<8x10xf32>
    tpu.vector_store %arg2[%c0_8, %c81], %33 {strides = array<i32>} : memref<8x136xf32, #tpu.memory_space<vmem>>, vector<8x10xf32>,
    %35 = vector.extract_strided_slice %0 {offsets = [0, 7], sizes = [8, 9], strides = [1, 1]} : vector<8x16xf32> to vector<8x9xf32>
    %36 = vector.extract_strided_slice %0 {offsets = [0, 7], sizes = [8, 1], strides = [1, 1]} : vector<8x16xf32> to vector<8x1xf32>
    %37 = vector.broadcast %36 : vector<8x1xf32> to vector<8x9xf32>
    %38 = arith.mulf %35, %37 : vector<8x9xf32>
    %c0_9 = arith.constant 0 : index
    %c91 = arith.constant 91 : index
    %39 = vector.load %arg2[%c0_9, %c91] : memref<8x136xf32, #tpu.memory_space<vmem>>, vector<8x9xf32>
    tpu.vector_store %arg2[%c0_9, %c91], %38 {strides = array<i32>} : memref<8x136xf32, #tpu.memory_space<vmem>>, vector<8x9xf32>,
    %40 = vector.extract_strided_slice %0 {offsets = [0, 8], sizes = [8, 8], strides = [1, 1]} : vector<8x16xf32> to vector<8x8xf32>
    %41 = vector.extract_strided_slice %0 {offsets = [0, 8], sizes = [8, 1], strides = [1, 1]} : vector<8x16xf32> to vector<8x1xf32>
    %42 = vector.broadcast %41 : vector<8x1xf32> to vector<8x8xf32>
    %43 = arith.mulf %40, %42 : vector<8x8xf32>
    %c0_10 = arith.constant 0 : index
    %c100 = arith.constant 100 : index
    %44 = vector.load %arg2[%c0_10, %c100] : memref<8x136xf32, #tpu.memory_space<vmem>>, vector<8x8xf32>
    tpu.vector_store %arg2[%c0_10, %c100], %43 {strides = array<i32>} : memref<8x136xf32, #tpu.memory_space<vmem>>, vector<8x8xf32>,
    %45 = vector.extract_strided_slice %0 {offsets = [0, 9], sizes = [8, 7], strides = [1, 1]} : vector<8x16xf32> to vector<8x7xf32>
    %46 = vector.extract_strided_slice %0 {offsets = [0, 9], sizes = [8, 1], strides = [1, 1]} : vector<8x16xf32> to vector<8x1xf32>
    %47 = vector.broadcast %46 : vector<8x1xf32> to vector<8x7xf32>
    %48 = arith.mulf %45, %47 : vector<8x7xf32>
    %c0_11 = arith.constant 0 : index
    %c108 = arith.constant 108 : index
    %49 = vector.load %arg2[%c0_11, %c108] : memref<8x136xf32, #tpu.memory_space<vmem>>, vector<8x7xf32>
    tpu.vector_store %arg2[%c0_11, %c108], %48 {strides = array<i32>} : memref<8x136xf32, #tpu.memory_space<vmem>>, vector<8x7xf32>,
    %50 = vector.extract_strided_slice %0 {offsets = [0, 10], sizes = [8, 6], strides = [1, 1]} : vector<8x16xf32> to vector<8x6xf32>
    %51 = vector.extract_strided_slice %0 {offsets = [0, 10], sizes = [8, 1], strides = [1, 1]} : vector<8x16xf32> to vector<8x1xf32>
    %52 = vector.broadcast %51 : vector<8x1xf32> to vector<8x6xf32>
    %53 = arith.mulf %50, %52 : vector<8x6xf32>
    %c0_12 = arith.constant 0 : index
    %c115 = arith.constant 115 : index
    %54 = vector.load %arg2[%c0_12, %c115] : memref<8x136xf32, #tpu.memory_space<vmem>>, vector<8x6xf32>
    tpu.vector_store %arg2[%c0_12, %c115], %53 {strides = array<i32>} : memref<8x136xf32, #tpu.memory_space<vmem>>, vector<8x6xf32>,
    %55 = vector.extract_strided_slice %0 {offsets = [0, 11], sizes = [8, 5], strides = [1, 1]} : vector<8x16xf32> to vector<8x5xf32>
    %56 = vector.extract_strided_slice %0 {offsets = [0, 11], sizes = [8, 1], strides = [1, 1]} : vector<8x16xf32> to vector<8x1xf32>
    %57 = vector.broadcast %56 : vector<8x1xf32> to vector<8x5xf32>
    %58 = arith.mulf %55, %57 : vector<8x5xf32>
    %c0_13 = arith.constant 0 : index
    %c121 = arith.constant 121 : index
    %59 = vector.load %arg2[%c0_13, %c121] : memref<8x136xf32, #tpu.memory_space<vmem>>, vector<8x5xf32>
    tpu.vector_store %arg2[%c0_13, %c121], %58 {strides = array<i32>} : memref<8x136xf32, #tpu.memory_space<vmem>>, vector<8x5xf32>,
    %60 = vector.extract_strided_slice %0 {offsets = [0, 12], sizes = [8, 4], strides = [1, 1]} : vector<8x16xf32> to vector<8x4xf32>
    %61 = vector.extract_strided_slice %0 {offsets = [0, 12], sizes = [8, 1], strides = [1, 1]} : vector<8x16xf32> to vector<8x1xf32>
    %62 = vector.broadcast %61 : vector<8x1xf32> to vector<8x4xf32>
    %63 = arith.mulf %60, %62 : vector<8x4xf32>
    %c0_14 = arith.constant 0 : index
    %c126 = arith.constant 126 : index
    %64 = vector.load %arg2[%c0_14, %c126] : memref<8x136xf32, #tpu.memory_space<vmem>>, vector<8x4xf32>
    tpu.vector_store %arg2[%c0_14, %c126], %63 {strides = array<i32>} : memref<8x136xf32, #tpu.memory_space<vmem>>, vector<8x4xf32>,
    %65 = vector.extract_strided_slice %0 {offsets = [0, 13], sizes = [8, 3], strides = [1, 1]} : vector<8x16xf32> to vector<8x3xf32>
    %66 = vector.extract_strided_slice %0 {offsets = [0, 13], sizes = [8, 1], strides = [1, 1]} : vector<8x16xf32> to vector<8x1xf32>
    %67 = vector.broadcast %66 : vector<8x1xf32> to vector<8x3xf32>
    %68 = arith.mulf %65, %67 : vector<8x3xf32>
    %c0_15 = arith.constant 0 : index
    %c130 = arith.constant 130 : index
    %69 = vector.load %arg2[%c0_15, %c130] : memref<8x136xf32, #tpu.memory_space<vmem>>, vector<8x3xf32>
    tpu.vector_store %arg2[%c0_15, %c130], %68 {strides = array<i32>} : memref<8x136xf32, #tpu.memory_space<vmem>>, vector<8x3xf32>,
    %70 = vector.extract_strided_slice %0 {offsets = [0, 14], sizes = [8, 2], strides = [1, 1]} : vector<8x16xf32> to vector<8x2xf32>
    %71 = vector.extract_strided_slice %0 {offsets = [0, 14], sizes = [8, 1], strides = [1, 1]} : vector<8x16xf32> to vector<8x1xf32>
    %72 = vector.broadcast %71 : vector<8x1xf32> to vector<8x2xf32>
    %73 = arith.mulf %70, %72 : vector<8x2xf32>
    %c0_16 = arith.constant 0 : index
    %c133 = arith.constant 133 : index
    %74 = vector.load %arg2[%c0_16, %c133] : memref<8x136xf32, #tpu.memory_space<vmem>>, vector<8x2xf32>
    tpu.vector_store %arg2[%c0_16, %c133], %73 {strides = array<i32>} : memref<8x136xf32, #tpu.memory_space<vmem>>, vector<8x2xf32>,
    %75 = vector.extract_strided_slice %0 {offsets = [0, 15], sizes = [8, 1], strides = [1, 1]} : vector<8x16xf32> to vector<8x1xf32>
    %76 = vector.extract_strided_slice %0 {offsets = [0, 15], sizes = [8, 1], strides = [1, 1]} : vector<8x16xf32> to vector<8x1xf32>
    %77 = arith.mulf %75, %76 : vector<8x1xf32>
    %c0_17 = arith.constant 0 : index
    %c135 = arith.constant 135 : index
    %78 = vector.load %arg2[%c0_17, %c135] : memref<8x136xf32, #tpu.memory_space<vmem>>, vector<8x1xf32>
    tpu.vector_store %arg2[%c0_17, %c135], %77 {strides = array<i32>} : memref<8x136xf32, #tpu.memory_space<vmem>>, vector<8x1xf32>,
    return
  }
  func.func @transform_0(%arg0: i32) -> (i32, i32) {
    %c0_i32 = arith.constant 0 : i32
    %c0_i32_0 = arith.constant 0 : i32
    return %arg0, %c0_i32 : i32, i32
  }
  func.func @transform_1(%arg0: i32) -> (i32, i32) {
    %c0_i32 = arith.constant 0 : i32
    %c0_i32_0 = arith.constant 0 : i32
    return %arg0, %c0_i32 : i32, i32
  }
}

</mosaic_0001>

<llo_original>
// kernel: tpu_custom_call.1
$region0: #{tpu_custom_call.1}
  #allocation0 [shape = 'u32[]', space=smem, size = 0x4, offset = 0x4, fixed_abs, tag = 'smem constant byte address 0x4 - core index']
  #allocation1 [shape = 'u32[72,128]{1,0:T(1,128)}', space=vmem, size = 0x9000, scoped, tag = 'internal scratch']
  %s0 = inlined_call_operand.hbm [shape: f32[8,16], index: 0, kind: input, shape index: {}]
  %s1 = inlined_call_operand.hbm [shape: f32[8,136], index: 1, kind: output, shape index: {}]
  %s2 = sld [smem:[#allocation0]]
  $region18: #{tpu_custom_call.1} parent=0
    _
  %s4 = ssub.s32 1, %s2
  %s5 = scalar_select 0, %s4, %s2
  $region1: #{tpu_custom_call.1} parent=0
    #allocation2 [shape = 'u8[4096]{0}', space=vmem, size = 0x1000, scoped, tag = 'input window, operand 0, single buffered']
    #allocation3 [shape = 's32[1]{0}', space=sflag, size = 0x4, scoped, tag = 'scoped memory for tpu_custom_call.1']
    #allocation4 [shape = 's32[1]{0}', space=sflag, size = 0x4, scoped, tag = 'scoped memory for tpu_custom_call.1']
    #allocation5 [shape = 'u8[8192]{0}', space=vmem, size = 0x2000, scoped, tag = 'output window, operand 0, single buffered']
    %6 = vsyncpa [#allocation3], 0
    %7 = vsyncpa [#allocation4], 0
    // Predicated region
    $region2: #{tpu_custom_call.1} parent=1 // pred_check
      _
    $region3: #{tpu_custom_call.1} parent=1 // pred_check_branch
      %9 = sbr.rel (0) target = $region5
    $region4: #{tpu_custom_call.1} parent=1 // pred_region
      %11 = vsyncadd [#allocation3], 0
      %s13 = sshll.u32 %s0, 4
      %s14 = int_to_ptr.hbm [resolvable:$true] %s13
      %s15 = sshll.u32 [#allocation2], 4
      %s16 = int_to_ptr.vmem [resolvable:$true] %s15
      %18 = dma.hbm_to_vmem [thread:$0]  %s14, 128, %s16, [#allocation3]
    $region5: #{tpu_custom_call.1} parent=1 // pred_fallthru
      _
    // Predicated region
    $region6: #{tpu_custom_call.1} parent=1 // pred_check
      _
    $region7: #{tpu_custom_call.1} parent=1 // pred_check_branch
      %20 = sbr.rel (0) target = $region9
    $region8: #{tpu_custom_call.1} parent=1 // pred_region
      %22 = dma.done [#allocation3], 128
    $region9: #{tpu_custom_call.1} parent=1 // pred_fallthru
      _
    %v23 = vld [vmem:[#allocation2] sm:$0xff]
    %25 = vset.pattern.permute.xlu0 0
    %26 = vperm.xlu0 %25, %v23
    %v27 = vpop.permute.xlu0 %26
    %v29 = vmul.f32 %v23, %v27
    %vm30 = vcmask 130048
    %31 = vst.msk [vmem:[#allocation5] sm:$0xff] %vm30, %v29
    %32 = vset.pattern.permute.xlu0 1
    %33 = vperm.xlu0 %32, %v23
    %v34 = vpop.permute.xlu0 %33
    %v36 = vmul.f32 %v23, %v34
    %38 = vrot.lane.b32.xlu0 %v36, 15
    %v39 = vpop.permute.xlu0 %38
    %vm41 = vcmask 253056
    %42 = vst.msk [vmem:[#allocation5] sm:$0xff] %vm41, %v39
    %43 = vset.pattern.permute.xlu0 2
    %44 = vperm.xlu0 %43, %v23
    %v45 = vpop.permute.xlu0 %44
    %v47 = vmul.f32 %v23, %v45
    %49 = vrot.lane.b32.xlu0 %v47, 29
    %v50 = vpop.permute.xlu0 %49
    %vm52 = vcmask 367864
    %53 = vst.msk [vmem:[#allocation5] sm:$0xff] %vm52, %v50
    %54 = vset.pattern.permute.xlu0 3
    %55 = vperm.xlu0 %54, %v23
    %v56 = vpop.permute.xlu0 %55
    %v58 = vmul.f32 %v23, %v56
    %60 = vrot.lane.b32.xlu0 %v58, 42
    %v61 = vpop.permute.xlu0 %60
    %vm63 = vcmask 474472
    %64 = vst.msk [vmem:[#allocation5] sm:$0xff] %vm63, %v61
    %65 = vset.pattern.permute.xlu0 4
    %66 = vperm.xlu0 %65, %v23
    %v67 = vpop.permute.xlu0 %66
    %v69 = vmul.f32 %v23, %v67
    %71 = vrot.lane.b32.xlu0 %v69, 54
    %v72 = vpop.permute.xlu0 %71
    %vm74 = vcmask 572880
    %75 = vst.msk [vmem:[#allocation5] sm:$0xff] %vm74, %v72
    %76 = vset.pattern.permute.xlu0 5
    %77 = vperm.xlu0 %76, %v23
    %v78 = vpop.permute.xlu0 %77
    %v80 = vmul.f32 %v23, %v78
    %82 = vrot.lane.b32.xlu0 %v80, 65
    %v83 = vpop.permute.xlu0 %82
    %vm85 = vcmask 663088
    %86 = vst.msk [vmem:[#allocation5] sm:$0xff] %vm85, %v83
    %87 = vset.pattern.permute.xlu0 6
    %88 = vperm.xlu0 %87, %v23
    %v89 = vpop.permute.xlu0 %88
    %v91 = vmul.f32 %v23, %v89
    %93 = vrot.lane.b32.xlu0 %v91, 75
    %v94 = vpop.permute.xlu0 %93
    %vm96 = vcmask 745096
    %97 = vst.msk [vmem:[#allocation5] sm:$0xff] %vm96, %v94
    %98 = vset.pattern.permute.xlu0 7
    %99 = vperm.xlu0 %98, %v23
    %v100 = vpop.permute.xlu0 %99
    %v102 = vmul.f32 %v23, %v100
    %104 = vrot.lane.b32.xlu0 %v102, 84
    %v105 = vpop.permute.xlu0 %104
    %vm107 = vcmask 818904
    %108 = vst.msk [vmem:[#allocation5] sm:$0xff] %vm107, %v105
    %109 = vset.pattern.permute.xlu0 8
    %110 = vperm.xlu0 %109, %v23
    %v111 = vpop.permute.xlu0 %110
    %v113 = vmul.f32 %v23, %v111
    %115 = vrot.lane.b32.xlu0 %v113, 92
    %v116 = vpop.permute.xlu0 %115
    %vm118 = vcmask 884512
    %119 = vst.msk [vmem:[#allocation5] sm:$0xff] %vm118, %v116
    %120 = vset.pattern.permute.xlu0 9
    %121 = vperm.xlu0 %120, %v23
    %v122 = vpop.permute.xlu0 %121
    %v124 = vmul.f32 %v23, %v122
    %126 = vrot.lane.b32.xlu0 %v124, 99
    %v127 = vpop.permute.xlu0 %126
    %vm129 = vcmask 941920
    %130 = vst.msk [vmem:[#allocation5] sm:$0xff] %vm129, %v127
    %131 = vset.pattern.permute.xlu0 10
    %132 = vperm.xlu0 %131, %v23
    %v133 = vpop.permute.xlu0 %132
    %v135 = vmul.f32 %v23, %v133
    %137 = vrot.lane.b32.xlu0 %v135, 105
    %v138 = vpop.permute.xlu0 %137
    %vm140 = vcmask 991128
    %141 = vst.msk [vmem:[#allocation5] sm:$0xff] %vm140, %v138
    %142 = vset.pattern.permute.xlu0 11
    %143 = vperm.xlu0 %142, %v23
    %v144 = vpop.permute.xlu0 %143
    %v146 = vmul.f32 %v23, %v144
    %148 = vrot.lane.b32.xlu0 %v146, 110
    %v149 = vpop.permute.xlu0 %148
    %vm151 = vcmask 1032136
    %152 = vst.msk [vmem:[#allocation5] sm:$0xff] %vm151, %v149
    %153 = vset.pattern.permute.xlu0 12
    %154 = vperm.xlu0 %153, %v23
    %v155 = vpop.permute.xlu0 %154
    %v157 = vmul.f32 %v23, %v155
    %159 = vrot.lane.b32.xlu0 %v157, 114
    %v160 = vpop.permute.xlu0 %159
    %vm162 = vcmask 1048560
    %163 = vst.msk [vmem:[#allocation5] sm:$0xff] %vm162, %v160
    %vm164 = vcmask 15360
    %165 = vst.msk [vmem:[#allocation5 + $0x8] sm:$0xff] %vm164, %v160
    %166 = vset.pattern.permute.xlu0 13
    %167 = vperm.xlu0 %166, %v23
    %v168 = vpop.permute.xlu0 %167
    %v170 = vmul.f32 %v23, %v168
    %172 = vrot.lane.b32.xlu0 %v170, 117
    %v173 = vpop.permute.xlu0 %172
    %vm175 = vcmask 39952
    %176 = vst.msk [vmem:[#allocation5 + $0x8] sm:$0xff] %vm175, %v173
    %177 = vset.pattern.permute.xlu0 14
    %178 = vperm.xlu0 %177, %v23
    %v179 = vpop.permute.xlu0 %178
    %v181 = vmul.f32 %v23, %v179
    %183 = vrot.lane.b32.xlu0 %v181, 119
    %v184 = vpop.permute.xlu0 %183
    %vm186 = vcmask 56360
    %187 = vst.msk [vmem:[#allocation5 + $0x8] sm:$0xff] %vm186, %v184
    %v188 = vmul.f32 %v23, %v23
    %190 = vrot.lane.b32.xlu0 %v188, 120
    %v191 = vpop.permute.xlu0 %190
    %vm193 = vcmask 64568
    %194 = vst.msk [vmem:[#allocation5 + $0x8] sm:$0xff] %vm193, %v191
    // Predicated region
    $region10: #{tpu_custom_call.1} parent=1 // pred_check
      _
    $region11: #{tpu_custom_call.1} parent=1 // pred_check_branch
      %196 = sbr.rel (0) target = $region13
    $region12: #{tpu_custom_call.1} parent=1 // pred_region
      %198 = vsyncadd [#allocation4], 0
      %s200 = sshll.u32 [#allocation5], 4
      %s201 = int_to_ptr.vmem [resolvable:$true] %s200
      %s202 = sshll.u32 %s1, 4
      %s203 = int_to_ptr.hbm [resolvable:$true] %s202
      %205 = dma.vmem_to_hbm [thread:$0]  %s201, 256, %s203, [#allocation4]
    $region13: #{tpu_custom_call.1} parent=1 // pred_fallthru
      _
    // Predicated region
    $region14: #{tpu_custom_call.1} parent=1 // pred_check
      _
    $region15: #{tpu_custom_call.1} parent=1 // pred_check_branch
      %207 = sbr.rel (0) target = $region17
    $region16: #{tpu_custom_call.1} parent=1 // pred_region
      %209 = dma.done [#allocation4], 256
    $region17: #{tpu_custom_call.1} parent=1 // pred_fallthru
      _
    %210 = vsyncpa [#allocation3], 1
    %211 = vsyncpa [#allocation4], 1

</llo_original>
